<compile_context>
chip_gen: v5e
topology: v5e:2x2
jax: 0.10.0
libtpu: 0.0.40
codegen_flags: <defaults>
</compile_context>

<pallas_src>
import functools

import jax
import jax.numpy as jnp
from jax import lax
from jax.experimental import pallas as pl
from jax.experimental.pallas import tpu as pltpu

HIDDEN = 32


def _rnn_kernel(x_ref, h0_ref, whh_ref, wih_ref, b_ref, wout_ref, bout_ref,
                y_ref, hfin_ref, *, unroll):
    """One grid step == one time-chunk of the recurrence for one batch block.

    x_ref   : (Tc, Bb, 1)  raw inputs for this chunk (time-major)
    h0_ref  : (Bb, H)      initial hidden state
    whh_ref : (H, H)       W_hh^T
    wih_ref : (1, H)       W_ih row (input size is 1)
    b_ref   : (1, H)       fused bias  b_ih + b_hh
    wout_ref: (1, H)       output head weights (Linear(32 -> 1))
    bout_ref: (1, 1)       output head bias
    y_ref   : (Tc, Bb, 1)  per-step outputs  y_t = h_t @ W_out^T + b_out
    hfin_ref: (Bb, H)      hidden-state carry / final hidden state
                           (constant block index over the time axis => stays
                            VMEM-resident across chunks)
    """
    c = pl.program_id(1)            # time-chunk index ("arbitrary" axis)
    t_chunk = x_ref.shape[0]

    @pl.when(c == 0)
    def _():
        hfin_ref[...] = h0_ref[...]

    # Hoist all weight loads out of the serial loop (few vregs total).
    whh = whh_ref[...]              # (H, H)
    w_in = wih_ref[...]             # (1, H)
    b_in = b_ref[...]               # (1, H)
    w_out = wout_ref[...]           # (1, H)
    b_out = bout_ref[...]           # (1, 1)

    def body(t, h):
        # Fused input projection: (Bb,1)*(1,H)+(1,H) -> (Bb,H).  Independent of
        # h, so it is off the loop-carried dot->tanh critical path.
        pre = x_ref[t] * w_in + b_in
        h_new = jnp.tanh(pre + jnp.dot(h, whh,
                                       preferred_element_type=jnp.float32))
        # Fused output head: (Bb,H)*(1,H) -> lane reduce -> (Bb,1).  Nothing in
        # the recurrence depends on it, so it also hides under the chain.
        y_ref[t] = jnp.sum(h_new * w_out, axis=-1, keepdims=True) + b_out
        return h_new

    h_last = lax.fori_loop(0, t_chunk, body, hfin_ref[...], unroll=unroll)
    hfin_ref[...] = h_last


def _run_segment(x_tb1, h0, whh_t, w_ih, b, w_out, b_out, *,
                 t_chunk, batch_blocks):
    """Run an exact-fit segment of the sequence (t_total = n_chunks * t_chunk)."""
    t_total, bsz, _ = x_tb1.shape
    hdim = whh_t.shape[0]
    n_chunks = t_total // t_chunk
    b_blk = bsz // batch_blocks

    unroll = True if t_chunk <= 64 else 16
    kernel = functools.partial(_rnn_kernel, unroll=unroll)

    grid_spec = pltpu.PrefetchScalarGridSpec(
        num_scalar_prefetch=0,
        grid=(batch_blocks, n_chunks),
        in_specs=[
            pl.BlockSpec((t_chunk, b_blk, 1), lambda i, c: (c, i, 0)),   # x
            pl.BlockSpec((b_blk, hdim), lambda i, c: (i, 0)),            # h0
            pl.BlockSpec((hdim, hdim), lambda i, c: (0, 0)),             # W_hh^T
            pl.BlockSpec((1, hdim), lambda i, c: (0, 0)),                # W_ih row
            pl.BlockSpec((1, hdim), lambda i, c: (0, 0)),                # fused bias
            pl.BlockSpec((1, hdim), lambda i, c: (0, 0)),                # W_out row
            pl.BlockSpec((1, 1), lambda i, c: (0, 0)),                   # b_out
        ],
        out_specs=[
            pl.BlockSpec((t_chunk, b_blk, 1), lambda i, c: (c, i, 0)),   # y
            pl.BlockSpec((b_blk, hdim), lambda i, c: (i, 0)),            # h_final
        ],
    )

    return pl.pallas_call(
        kernel,
        out_shape=[
            jax.ShapeDtypeStruct((t_total, bsz, 1), jnp.float32),
            jax.ShapeDtypeStruct((bsz, hdim), jnp.float32),
        ],
        grid_spec=grid_spec,
        compiler_params=pltpu.CompilerParams(
            # Batch blocks are independent -> "parallel" (v7x 2-TC win; a serial
            # size-1 loop elsewhere).  The time recurrence is sequential.
            dimension_semantics=("parallel", "arbitrary"),
            vmem_limit_bytes=32 * 1024 * 1024),
    )(x_tb1, h0, whh_t, w_ih, b, w_out, b_out)


def rnn_forward(x, h_state, params, *, time_chunk=512, batch_blocks=None):
    """Batch-first forward matching the PyTorch module.

    x       : (B, T, 1) float32
    h_state : (1, B, H) float32 or None
    returns : (outs (B, T, 1), h_state (1, B, H))
    """
    B, T, _ = x.shape
    H = HIDDEN
    x = x.astype(jnp.float32)
    h = (jnp.zeros((B, H), jnp.float32) if h_state is None
         else h_state[0].astype(jnp.float32))

    # One-time tiny parameter re-layouts.
    whh_t = params["w_hh"].T.astype(jnp.float32)                       # (H, H)
    w_ih = params["w_ih"].reshape(1, H).astype(jnp.float32)            # (1, H)
    b = (params["b_ih"] + params["b_hh"]).reshape(1, H).astype(jnp.float32)
    w_out = params["w_out"].reshape(1, H).astype(jnp.float32)          # (1, H)
    b_out = params["b_out"].reshape(1, 1).astype(jnp.float32)          # (1, 1)

    # Time-major x: a (T*B*4)-byte relayout, 32x smaller than the old (T,B,H)
    # pre-activation intermediate.
    x_tb1 = jnp.transpose(x, (1, 0, 2))                                # (T, B, 1)

    if batch_blocks is None:
        batch_blocks = 2 if (B % 16 == 0) else 1
    if B % batch_blocks or (batch_blocks > 1 and (B // batch_blocks) % 8):
        batch_blocks = 1   # keep (8,128)-aligned batch blocks

    # Exact-fit segmentation of the time axis: n_full chunks of length t_chunk
    # plus an optional remainder segment -> no padding, no per-step tail mask.
    if T <= time_chunk:
        t_chunk, n_full, rem = T, 1, 0
    else:
        t_chunk = max(128, (time_chunk // 128) * 128)
        n_full = T // t_chunk
        rem = T - n_full * t_chunk

    ys = []
    if n_full > 0:
        y_main, h = _run_segment(x_tb1[:n_full * t_chunk], h, whh_t, w_ih, b,
                                 w_out, b_out, t_chunk=t_chunk,
                                 batch_blocks=batch_blocks)
        ys.append(y_main)
    if rem > 0:
        y_rem, h = _run_segment(x_tb1[n_full * t_chunk:], h, whh_t, w_ih, b,
                                w_out, b_out, t_chunk=rem,
                                batch_blocks=batch_blocks)
        ys.append(y_rem)

    y = ys[0] if len(ys) == 1 else jnp.concatenate(ys, axis=0)         # (T, B, 1)
    outs = jnp.transpose(y, (1, 0, 2))                                 # (B, T, 1)
    return outs, h[None]                                               # (1, B, H)


def _reference_forward(x, h_state, params):
    """Pure-JAX (lax.scan) reference of the PyTorch module."""
    B, _, _ = x.shape
    H = HIDDEN
    h0 = (jnp.zeros((B, H), jnp.float32) if h_state is None
          else h_state[0].astype(jnp.float32))
    w_ih, w_hh = params["w_ih"], params["w_hh"]
    b = params["b_ih"] + params["b_hh"]
    w_out, b_out = params["w_out"], params["b_out"]

    def step(h, x_t):
        h = jnp.tanh(x_t @ w_ih.T + b + h @ w_hh.T)
        return h, h @ w_out.T + b_out

    h_fin, ys = lax.scan(step, h0, jnp.transpose(x, (1, 0, 2)))        # (T, B, 1)
    return jnp.transpose(ys, (1, 0, 2)), h_fin[None]


def init_params(key):
    H = HIDDEN
    k = jax.random.split(key, 6)
    s = 1.0 / jnp.sqrt(H)
    return {
        "w_ih": jax.random.uniform(k[0], (H, 1), jnp.float32, -s, s),
        "w_hh": jax.random.uniform(k[1], (H, H), jnp.float32, -s, s),
        "b_ih": jax.random.uniform(k[2], (H,), jnp.float32, -s, s),
        "b_hh": jax.random.uniform(k[3], (H,), jnp.float32, -s, s),
        "w_out": jax.random.uniform(k[4], (1, H), jnp.float32, -s, s),
        "b_out": jax.random.uniform(k[5], (1,), jnp.float32, -s, s),
    }


if __name__ == "__main__":
    key = jax.random.PRNGKey(0)
    kx, kh, kp = jax.random.split(key, 3)

    B, T = 2, 8
    x = jax.random.normal(kx, (B, T, 1), jnp.float32)
    h_state = jax.random.normal(kh, (1, B, HIDDEN), jnp.float32)
    params = init_params(kp)

    outs, h_new = rnn_forward(x, h_state, params)
    outs = jax.block_until_ready(outs)
    h_new = jax.block_until_ready(h_new)

    ref_outs, ref_h = _reference_forward(x, h_state, params)
    assert outs.shape == (B, T, 1) and h_new.shape == (1, B, HIDDEN)
    assert jnp.allclose(outs, ref_outs, atol=1e-5, rtol=1e-5)
    assert jnp.allclose(h_new, ref_h, atol=1e-5, rtol=1e-5)

    # h_state=None path (zero initial hidden state).
    outs0, h0_new = rnn_forward(x, None, params)
    ref_outs0, ref_h0 = _reference_forward(x, None, params)
    assert jnp.allclose(jax.block_until_ready(outs0), ref_outs0, atol=1e-5, rtol=1e-5)
    assert jnp.allclose(jax.block_until_ready(h0_new), ref_h0, atol=1e-5, rtol=1e-5)

    # Longer sequence exercising the multi-chunk carry and remainder segment.
    T2 = 300
    x2 = jax.random.normal(jax.random.PRNGKey(1), (B, T2, 1), jnp.float32)
    outs2, h2 = rnn_forward(x2, h_state, params, time_chunk=128)
    ref_outs2, ref_h2 = _reference_forward(x2, h_state, params)
    assert jnp.allclose(jax.block_until_ready(outs2), ref_outs2, atol=1e-4, rtol=1e-4)
    assert jnp.allclose(jax.block_until_ready(h2), ref_h2, atol=1e-4, rtol=1e-4)

    print("KERNEL_OK")
</pallas_src>

<mosaic_0001>
module attributes {stable_mosaic.version = 11 : i64} {
  func.func @_rnn_kernel(%arg0: i32, %arg1: i32, %arg2: memref<8x2x1xf32, #tpu.memory_space<vmem>>, %arg3: memref<2x32xf32, #tpu.memory_space<vmem>>, %arg4: memref<32x32xf32, #tpu.memory_space<vmem>>, %arg5: memref<1x32xf32, #tpu.memory_space<vmem>>, %arg6: memref<1x32xf32, #tpu.memory_space<vmem>>, %arg7: memref<1x32xf32, #tpu.memory_space<vmem>>, %arg8: memref<1x1xf32, #tpu.memory_space<vmem>>, %arg9: memref<8x2x1xf32, #tpu.memory_space<vmem>>, %arg10: memref<2x32xf32, #tpu.memory_space<vmem>>) attributes {dimension_semantics = [#tpu.dimension_semantics<parallel>, #tpu.dimension_semantics<arbitrary>], iteration_bounds = array<i64: 1, 1>, scalar_prefetch = 0 : i64, scratch_operands = 0 : i64, tpu.core_type = #tpu.core_type<tc>, window_params = [{transform_indices = @transform_0, window_bounds = array<i64: 8, 2, 1>}, {transform_indices = @transform_1, window_bounds = array<i64: 2, 32>}, {pipeline_mode = #tpu.pipeline_mode<synchronous>, transform_indices = @transform_2, window_bounds = array<i64: 32, 32>}, {pipeline_mode = #tpu.pipeline_mode<synchronous>, transform_indices = @transform_3, window_bounds = array<i64: 1, 32>}, {pipeline_mode = #tpu.pipeline_mode<synchronous>, transform_indices = @transform_4, window_bounds = array<i64: 1, 32>}, {pipeline_mode = #tpu.pipeline_mode<synchronous>, transform_indices = @transform_5, window_bounds = array<i64: 1, 32>}, {pipeline_mode = #tpu.pipeline_mode<synchronous>, transform_indices = @transform_6, window_bounds = array<i64: 1, 1>}, {transform_indices = @transform_7, window_bounds = array<i64: 8, 2, 1>}, {transform_indices = @transform_8, window_bounds = array<i64: 2, 32>}]} {
    %c0_i32 = arith.constant 0 : i32
    %0 = arith.cmpi eq, %arg1, %c0_i32 : i32
    %1 = arith.extui %0 : i1 to i32
    %c0_i32_0 = arith.constant 0 : i32
    %2 = arith.cmpi ne, %1, %c0_i32_0 : i32
    scf.if %2 {
      %c0_62 = arith.constant 0 : index
      %c0_63 = arith.constant 0 : index
      %178 = vector.load %arg3[%c0_62, %c0_63] : memref<2x32xf32, #tpu.memory_space<vmem>>, vector<2x32xf32>
      %c0_64 = arith.constant 0 : index
      %c0_65 = arith.constant 0 : index
      %179 = vector.load %arg10[%c0_64, %c0_65] : memref<2x32xf32, #tpu.memory_space<vmem>>, vector<2x32xf32>
      tpu.vector_store %arg10[%c0_64, %c0_65], %178 {strides = array<i32>} : memref<2x32xf32, #tpu.memory_space<vmem>>, vector<2x32xf32>,
    } else {
    }
    %c0 = arith.constant 0 : index
    %c0_1 = arith.constant 0 : index
    %3 = vector.load %arg4[%c0, %c0_1] : memref<32x32xf32, #tpu.memory_space<vmem>>, vector<32x32xf32>
    %c0_2 = arith.constant 0 : index
    %c0_3 = arith.constant 0 : index
    %4 = vector.load %arg5[%c0_2, %c0_3] : memref<1x32xf32, #tpu.memory_space<vmem>>, vector<1x32xf32>
    %c0_4 = arith.constant 0 : index
    %c0_5 = arith.constant 0 : index
    %5 = vector.load %arg6[%c0_4, %c0_5] : memref<1x32xf32, #tpu.memory_space<vmem>>, vector<1x32xf32>
    %c0_6 = arith.constant 0 : index
    %c0_7 = arith.constant 0 : index
    %6 = vector.load %arg7[%c0_6, %c0_7] : memref<1x32xf32, #tpu.memory_space<vmem>>, vector<1x32xf32>
    %c0_8 = arith.constant 0 : index
    %c0_9 = arith.constant 0 : index
    %7 = vector.load %arg8[%c0_8, %c0_9] : memref<1x1xf32, #tpu.memory_space<vmem>>, vector<1x1xf32>
    %c0_10 = arith.constant 0 : index
    %c0_11 = arith.constant 0 : index
    %8 = vector.load %arg10[%c0_10, %c0_11] : memref<2x32xf32, #tpu.memory_space<vmem>>, vector<2x32xf32>
    %c0_i32_12 = arith.constant 0 : i32
    %9 = arith.index_cast %c0_i32_12 : i32 to index
    %c0_13 = arith.constant 0 : index
    %c0_14 = arith.constant 0 : index
    %10 = vector.load %arg2[%9, %c0_13, %c0_14] : memref<8x2x1xf32, #tpu.memory_space<vmem>>, vector<1x2x1xf32>
    %11 = vector.shape_cast %10 : vector<1x2x1xf32> to vector<2x1xf32>
    %12 = vector.broadcast %11 : vector<2x1xf32> to vector<2x32xf32>
    %13 = vector.broadcast %4 : vector<1x32xf32> to vector<2x32xf32>
    %14 = arith.mulf %12, %13 : vector<2x32xf32>
    %15 = vector.broadcast %5 : vector<1x32xf32> to vector<2x32xf32>
    %16 = arith.addf %14, %15 : vector<2x32xf32>
    %cst = arith.constant dense<0.000000e+00> : vector<2x32xf32>
    %17 = tpu.matmul %8, %3, %cst {dimension_numbers = #tpu.dot_dimension_numbers<[1], [0], [0], [1], [0, 0, 1, 1], [], []>} : vector<2x32xf32>, vector<32x32xf32>, vector<2x32xf32> -> vector<2x32xf32>
    %18 = arith.addf %16, %17 : vector<2x32xf32>
    %19 = math.tanh %18 : vector<2x32xf32>
    %20 = vector.broadcast %6 : vector<1x32xf32> to vector<2x32xf32>
    %21 = arith.mulf %19, %20 : vector<2x32xf32>
    %cst_15 = arith.constant dense<0.000000e+00> : vector<2xf32>
    %22 = vector.multi_reduction <add>, %21, %cst_15 [1] : vector<2x32xf32> to vector<2xf32>
    %23 = vector.shape_cast %22 : vector<2xf32> to vector<2x1xf32>
    %24 = vector.broadcast %7 : vector<1x1xf32> to vector<2x1xf32>
    %25 = arith.addf %23, %24 : vector<2x1xf32>
    %26 = arith.index_cast %c0_i32_12 : i32 to index
    %c0_16 = arith.constant 0 : index
    %c0_17 = arith.constant 0 : index
    %27 = vector.load %arg9[%26, %c0_16, %c0_17] : memref<8x2x1xf32, #tpu.memory_space<vmem>>, vector<1x2x1xf32>
    %28 = vector.shape_cast %27 : vector<1x2x1xf32> to vector<2x1xf32>
    %29 = vector.shape_cast %25 : vector<2x1xf32> to vector<1x2x1xf32>
    tpu.vector_store %arg9[%26, %c0_16, %c0_17], %29 {strides = array<i32>} : memref<8x2x1xf32, #tpu.memory_space<vmem>>, vector<1x2x1xf32>,
    %c1_i32 = arith.constant 1 : i32
    %30 = arith.index_cast %c1_i32 : i32 to index
    %c0_18 = arith.constant 0 : index
    %c0_19 = arith.constant 0 : index
    %31 = vector.load %arg2[%30, %c0_18, %c0_19] : memref<8x2x1xf32, #tpu.memory_space<vmem>>, vector<1x2x1xf32>
    %32 = vector.shape_cast %31 : vector<1x2x1xf32> to vector<2x1xf32>
    %33 = vector.broadcast %32 : vector<2x1xf32> to vector<2x32xf32>
    %34 = vector.broadcast %4 : vector<1x32xf32> to vector<2x32xf32>
    %35 = arith.mulf %33, %34 : vector<2x32xf32>
    %36 = vector.broadcast %5 : vector<1x32xf32> to vector<2x32xf32>
    %37 = arith.addf %35, %36 : vector<2x32xf32>
    %cst_20 = arith.constant dense<0.000000e+00> : vector<2x32xf32>
    %38 = tpu.matmul %19, %3, %cst_20 {dimension_numbers = #tpu.dot_dimension_numbers<[1], [0], [0], [1], [0, 0, 1, 1], [], []>} : vector<2x32xf32>, vector<32x32xf32>, vector<2x32xf32> -> vector<2x32xf32>
    %39 = arith.addf %37, %38 : vector<2x32xf32>
    %40 = math.tanh %39 : vector<2x32xf32>
    %41 = vector.broadcast %6 : vector<1x32xf32> to vector<2x32xf32>
    %42 = arith.mulf %40, %41 : vector<2x32xf32>
    %cst_21 = arith.constant dense<0.000000e+00> : vector<2xf32>
    %43 = vector.multi_reduction <add>, %42, %cst_21 [1] : vector<2x32xf32> to vector<2xf32>
    %44 = vector.shape_cast %43 : vector<2xf32> to vector<2x1xf32>
    %45 = vector.broadcast %7 : vector<1x1xf32> to vector<2x1xf32>
    %46 = arith.addf %44, %45 : vector<2x1xf32>
    %47 = arith.index_cast %c1_i32 : i32 to index
    %c0_22 = arith.constant 0 : index
    %c0_23 = arith.constant 0 : index
    %48 = vector.load %arg9[%47, %c0_22, %c0_23] : memref<8x2x1xf32, #tpu.memory_space<vmem>>, vector<1x2x1xf32>
    %49 = vector.shape_cast %48 : vector<1x2x1xf32> to vector<2x1xf32>
    %50 = vector.shape_cast %46 : vector<2x1xf32> to vector<1x2x1xf32>
    tpu.vector_store %arg9[%47, %c0_22, %c0_23], %50 {strides = array<i32>} : memref<8x2x1xf32, #tpu.memory_space<vmem>>, vector<1x2x1xf32>,
    %c2_i32 = arith.constant 2 : i32
    %51 = arith.index_cast %c2_i32 : i32 to index
    %c0_24 = arith.constant 0 : index
    %c0_25 = arith.constant 0 : index
    %52 = vector.load %arg2[%51, %c0_24, %c0_25] : memref<8x2x1xf32, #tpu.memory_space<vmem>>, vector<1x2x1xf32>
    %53 = vector.shape_cast %52 : vector<1x2x1xf32> to vector<2x1xf32>
    %54 = vector.broadcast %53 : vector<2x1xf32> to vector<2x32xf32>
    %55 = vector.broadcast %4 : vector<1x32xf32> to vector<2x32xf32>
    %56 = arith.mulf %54, %55 : vector<2x32xf32>
    %57 = vector.broadcast %5 : vector<1x32xf32> to vector<2x32xf32>
    %58 = arith.addf %56, %57 : vector<2x32xf32>
    %cst_26 = arith.constant dense<0.000000e+00> : vector<2x32xf32>
    %59 = tpu.matmul %40, %3, %cst_26 {dimension_numbers = #tpu.dot_dimension_numbers<[1], [0], [0], [1], [0, 0, 1, 1], [], []>} : vector<2x32xf32>, vector<32x32xf32>, vector<2x32xf32> -> vector<2x32xf32>
    %60 = arith.addf %58, %59 : vector<2x32xf32>
    %61 = math.tanh %60 : vector<2x32xf32>
    %62 = vector.broadcast %6 : vector<1x32xf32> to vector<2x32xf32>
    %63 = arith.mulf %61, %62 : vector<2x32xf32>
    %cst_27 = arith.constant dense<0.000000e+00> : vector<2xf32>
    %64 = vector.multi_reduction <add>, %63, %cst_27 [1] : vector<2x32xf32> to vector<2xf32>
    %65 = vector.shape_cast %64 : vector<2xf32> to vector<2x1xf32>
    %66 = vector.broadcast %7 : vector<1x1xf32> to vector<2x1xf32>
    %67 = arith.addf %65, %66 : vector<2x1xf32>
    %68 = arith.index_cast %c2_i32 : i32 to index
    %c0_28 = arith.constant 0 : index
    %c0_29 = arith.constant 0 : index
    %69 = vector.load %arg9[%68, %c0_28, %c0_29] : memref<8x2x1xf32, #tpu.memory_space<vmem>>, vector<1x2x1xf32>
    %70 = vector.shape_cast %69 : vector<1x2x1xf32> to vector<2x1xf32>
    %71 = vector.shape_cast %67 : vector<2x1xf32> to vector<1x2x1xf32>
    tpu.vector_store %arg9[%68, %c0_28, %c0_29], %71 {strides = array<i32>} : memref<8x2x1xf32, #tpu.memory_space<vmem>>, vector<1x2x1xf32>,
    %c3_i32 = arith.constant 3 : i32
    %72 = arith.index_cast %c3_i32 : i32 to index
    %c0_30 = arith.constant 0 : index
    %c0_31 = arith.constant 0 : index
    %73 = vector.load %arg2[%72, %c0_30, %c0_31] : memref<8x2x1xf32, #tpu.memory_space<vmem>>, vector<1x2x1xf32>
    %74 = vector.shape_cast %73 : vector<1x2x1xf32> to vector<2x1xf32>
    %75 = vector.broadcast %74 : vector<2x1xf32> to vector<2x32xf32>
    %76 = vector.broadcast %4 : vector<1x32xf32> to vector<2x32xf32>
    %77 = arith.mulf %75, %76 : vector<2x32xf32>
    %78 = vector.broadcast %5 : vector<1x32xf32> to vector<2x32xf32>
    %79 = arith.addf %77, %78 : vector<2x32xf32>
    %cst_32 = arith.constant dense<0.000000e+00> : vector<2x32xf32>
    %80 = tpu.matmul %61, %3, %cst_32 {dimension_numbers = #tpu.dot_dimension_numbers<[1], [0], [0], [1], [0, 0, 1, 1], [], []>} : vector<2x32xf32>, vector<32x32xf32>, vector<2x32xf32> -> vector<2x32xf32>
    %81 = arith.addf %79, %80 : vector<2x32xf32>
    %82 = math.tanh %81 : vector<2x32xf32>
    %83 = vector.broadcast %6 : vector<1x32xf32> to vector<2x32xf32>
    %84 = arith.mulf %82, %83 : vector<2x32xf32>
    %cst_33 = arith.constant dense<0.000000e+00> : vector<2xf32>
    %85 = vector.multi_reduction <add>, %84, %cst_33 [1] : vector<2x32xf32> to vector<2xf32>
    %86 = vector.shape_cast %85 : vector<2xf32> to vector<2x1xf32>
    %87 = vector.broadcast %7 : vector<1x1xf32> to vector<2x1xf32>
    %88 = arith.addf %86, %87 : vector<2x1xf32>
    %89 = arith.index_cast %c3_i32 : i32 to index
    %c0_34 = arith.constant 0 : index
    %c0_35 = arith.constant 0 : index
    %90 = vector.load %arg9[%89, %c0_34, %c0_35] : memref<8x2x1xf32, #tpu.memory_space<vmem>>, vector<1x2x1xf32>
    %91 = vector.shape_cast %90 : vector<1x2x1xf32> to vector<2x1xf32>
    %92 = vector.shape_cast %88 : vector<2x1xf32> to vector<1x2x1xf32>
    tpu.vector_store %arg9[%89, %c0_34, %c0_35], %92 {strides = array<i32>} : memref<8x2x1xf32, #tpu.memory_space<vmem>>, vector<1x2x1xf32>,
    %c4_i32 = arith.constant 4 : i32
    %93 = arith.index_cast %c4_i32 : i32 to index
    %c0_36 = arith.constant 0 : index
    %c0_37 = arith.constant 0 : index
    %94 = vector.load %arg2[%93, %c0_36, %c0_37] : memref<8x2x1xf32, #tpu.memory_space<vmem>>, vector<1x2x1xf32>
    %95 = vector.shape_cast %94 : vector<1x2x1xf32> to vector<2x1xf32>
    %96 = vector.broadcast %95 : vector<2x1xf32> to vector<2x32xf32>
    %97 = vector.broadcast %4 : vector<1x32xf32> to vector<2x32xf32>
    %98 = arith.mulf %96, %97 : vector<2x32xf32>
    %99 = vector.broadcast %5 : vector<1x32xf32> to vector<2x32xf32>
    %100 = arith.addf %98, %99 : vector<2x32xf32>
    %cst_38 = arith.constant dense<0.000000e+00> : vector<2x32xf32>
    %101 = tpu.matmul %82, %3, %cst_38 {dimension_numbers = #tpu.dot_dimension_numbers<[1], [0], [0], [1], [0, 0, 1, 1], [], []>} : vector<2x32xf32>, vector<32x32xf32>, vector<2x32xf32> -> vector<2x32xf32>
    %102 = arith.addf %100, %101 : vector<2x32xf32>
    %103 = math.tanh %102 : vector<2x32xf32>
    %104 = vector.broadcast %6 : vector<1x32xf32> to vector<2x32xf32>
    %105 = arith.mulf %103, %104 : vector<2x32xf32>
    %cst_39 = arith.constant dense<0.000000e+00> : vector<2xf32>
    %106 = vector.multi_reduction <add>, %105, %cst_39 [1] : vector<2x32xf32> to vector<2xf32>
    %107 = vector.shape_cast %106 : vector<2xf32> to vector<2x1xf32>
    %108 = vector.broadcast %7 : vector<1x1xf32> to vector<2x1xf32>
    %109 = arith.addf %107, %108 : vector<2x1xf32>
    %110 = arith.index_cast %c4_i32 : i32 to index
    %c0_40 = arith.constant 0 : index
    %c0_41 = arith.constant 0 : index
    %111 = vector.load %arg9[%110, %c0_40, %c0_41] : memref<8x2x1xf32, #tpu.memory_space<vmem>>, vector<1x2x1xf32>
    %112 = vector.shape_cast %111 : vector<1x2x1xf32> to vector<2x1xf32>
    %113 = vector.shape_cast %109 : vector<2x1xf32> to vector<1x2x1xf32>
    tpu.vector_store %arg9[%110, %c0_40, %c0_41], %113 {strides = array<i32>} : memref<8x2x1xf32, #tpu.memory_space<vmem>>, vector<1x2x1xf32>,
    %c5_i32 = arith.constant 5 : i32
    %114 = arith.index_cast %c5_i32 : i32 to index
    %c0_42 = arith.constant 0 : index
    %c0_43 = arith.constant 0 : index
    %115 = vector.load %arg2[%114, %c0_42, %c0_43] : memref<8x2x1xf32, #tpu.memory_space<vmem>>, vector<1x2x1xf32>
    %116 = vector.shape_cast %115 : vector<1x2x1xf32> to vector<2x1xf32>
    %117 = vector.broadcast %116 : vector<2x1xf32> to vector<2x32xf32>
    %118 = vector.broadcast %4 : vector<1x32xf32> to vector<2x32xf32>
    %119 = arith.mulf %117, %118 : vector<2x32xf32>
    %120 = vector.broadcast %5 : vector<1x32xf32> to vector<2x32xf32>
    %121 = arith.addf %119, %120 : vector<2x32xf32>
    %cst_44 = arith.constant dense<0.000000e+00> : vector<2x32xf32>
    %122 = tpu.matmul %103, %3, %cst_44 {dimension_numbers = #tpu.dot_dimension_numbers<[1], [0], [0], [1], [0, 0, 1, 1], [], []>} : vector<2x32xf32>, vector<32x32xf32>, vector<2x32xf32> -> vector<2x32xf32>
    %123 = arith.addf %121, %122 : vector<2x32xf32>
    %124 = math.tanh %123 : vector<2x32xf32>
    %125 = vector.broadcast %6 : vector<1x32xf32> to vector<2x32xf32>
    %126 = arith.mulf %124, %125 : vector<2x32xf32>
    %cst_45 = arith.constant dense<0.000000e+00> : vector<2xf32>
    %127 = vector.multi_reduction <add>, %126, %cst_45 [1] : vector<2x32xf32> to vector<2xf32>
    %128 = vector.shape_cast %127 : vector<2xf32> to vector<2x1xf32>
    %129 = vector.broadcast %7 : vector<1x1xf32> to vector<2x1xf32>
    %130 = arith.addf %128, %129 : vector<2x1xf32>
    %131 = arith.index_cast %c5_i32 : i32 to index
    %c0_46 = arith.constant 0 : index
    %c0_47 = arith.constant 0 : index
    %132 = vector.load %arg9[%131, %c0_46, %c0_47] : memref<8x2x1xf32, #tpu.memory_space<vmem>>, vector<1x2x1xf32>
    %133 = vector.shape_cast %132 : vector<1x2x1xf32> to vector<2x1xf32>
    %134 = vector.shape_cast %130 : vector<2x1xf32> to vector<1x2x1xf32>
    tpu.vector_store %arg9[%131, %c0_46, %c0_47], %134 {strides = array<i32>} : memref<8x2x1xf32, #tpu.memory_space<vmem>>, vector<1x2x1xf32>,
    %c6_i32 = arith.constant 6 : i32
    %135 = arith.index_cast %c6_i32 : i32 to index
    %c0_48 = arith.constant 0 : index
    %c0_49 = arith.constant 0 : index
    %136 = vector.load %arg2[%135, %c0_48, %c0_49] : memref<8x2x1xf32, #tpu.memory_space<vmem>>, vector<1x2x1xf32>
    %137 = vector.shape_cast %136 : vector<1x2x1xf32> to vector<2x1xf32>
    %138 = vector.broadcast %137 : vector<2x1xf32> to vector<2x32xf32>
    %139 = vector.broadcast %4 : vector<1x32xf32> to vector<2x32xf32>
    %140 = arith.mulf %138, %139 : vector<2x32xf32>
    %141 = vector.broadcast %5 : vector<1x32xf32> to vector<2x32xf32>
    %142 = arith.addf %140, %141 : vector<2x32xf32>
    %cst_50 = arith.constant dense<0.000000e+00> : vector<2x32xf32>
    %143 = tpu.matmul %124, %3, %cst_50 {dimension_numbers = #tpu.dot_dimension_numbers<[1], [0], [0], [1], [0, 0, 1, 1], [], []>} : vector<2x32xf32>, vector<32x32xf32>, vector<2x32xf32> -> vector<2x32xf32>
    %144 = arith.addf %142, %143 : vector<2x32xf32>
    %145 = math.tanh %144 : vector<2x32xf32>
    %146 = vector.broadcast %6 : vector<1x32xf32> to vector<2x32xf32>
    %147 = arith.mulf %145, %146 : vector<2x32xf32>
    %cst_51 = arith.constant dense<0.000000e+00> : vector<2xf32>
    %148 = vector.multi_reduction <add>, %147, %cst_51 [1] : vector<2x32xf32> to vector<2xf32>
    %149 = vector.shape_cast %148 : vector<2xf32> to vector<2x1xf32>
    %150 = vector.broadcast %7 : vector<1x1xf32> to vector<2x1xf32>
    %151 = arith.addf %149, %150 : vector<2x1xf32>
    %152 = arith.index_cast %c6_i32 : i32 to index
    %c0_52 = arith.constant 0 : index
    %c0_53 = arith.constant 0 : index
    %153 = vector.load %arg9[%152, %c0_52, %c0_53] : memref<8x2x1xf32, #tpu.memory_space<vmem>>, vector<1x2x1xf32>
    %154 = vector.shape_cast %153 : vector<1x2x1xf32> to vector<2x1xf32>
    %155 = vector.shape_cast %151 : vector<2x1xf32> to vector<1x2x1xf32>
    tpu.vector_store %arg9[%152, %c0_52, %c0_53], %155 {strides = array<i32>} : memref<8x2x1xf32, #tpu.memory_space<vmem>>, vector<1x2x1xf32>,
    %c7_i32 = arith.constant 7 : i32
    %156 = arith.index_cast %c7_i32 : i32 to index
    %c0_54 = arith.constant 0 : index
    %c0_55 = arith.constant 0 : index
    %157 = vector.load %arg2[%156, %c0_54, %c0_55] : memref<8x2x1xf32, #tpu.memory_space<vmem>>, vector<1x2x1xf32>
    %158 = vector.shape_cast %157 : vector<1x2x1xf32> to vector<2x1xf32>
    %159 = vector.broadcast %158 : vector<2x1xf32> to vector<2x32xf32>
    %160 = vector.broadcast %4 : vector<1x32xf32> to vector<2x32xf32>
    %161 = arith.mulf %159, %160 : vector<2x32xf32>
    %162 = vector.broadcast %5 : vector<1x32xf32> to vector<2x32xf32>
    %163 = arith.addf %161, %162 : vector<2x32xf32>
    %cst_56 = arith.constant dense<0.000000e+00> : vector<2x32xf32>
    %164 = tpu.matmul %145, %3, %cst_56 {dimension_numbers = #tpu.dot_dimension_numbers<[1], [0], [0], [1], [0, 0, 1, 1], [], []>} : vector<2x32xf32>, vector<32x32xf32>, vector<2x32xf32> -> vector<2x32xf32>
    %165 = arith.addf %163, %164 : vector<2x32xf32>
    %166 = math.tanh %165 : vector<2x32xf32>
    %167 = vector.broadcast %6 : vector<1x32xf32> to vector<2x32xf32>
    %168 = arith.mulf %166, %167 : vector<2x32xf32>
    %cst_57 = arith.constant dense<0.000000e+00> : vector<2xf32>
    %169 = vector.multi_reduction <add>, %168, %cst_57 [1] : vector<2x32xf32> to vector<2xf32>
    %170 = vector.shape_cast %169 : vector<2xf32> to vector<2x1xf32>
    %171 = vector.broadcast %7 : vector<1x1xf32> to vector<2x1xf32>
    %172 = arith.addf %170, %171 : vector<2x1xf32>
    %173 = arith.index_cast %c7_i32 : i32 to index
    %c0_58 = arith.constant 0 : index
    %c0_59 = arith.constant 0 : index
    %174 = vector.load %arg9[%173, %c0_58, %c0_59] : memref<8x2x1xf32, #tpu.memory_space<vmem>>, vector<1x2x1xf32>
    %175 = vector.shape_cast %174 : vector<1x2x1xf32> to vector<2x1xf32>
    %176 = vector.shape_cast %172 : vector<2x1xf32> to vector<1x2x1xf32>
    tpu.vector_store %arg9[%173, %c0_58, %c0_59], %176 {strides = array<i32>} : memref<8x2x1xf32, #tpu.memory_space<vmem>>, vector<1x2x1xf32>,
    %c8_i32 = arith.constant 8 : i32
    %c0_60 = arith.constant 0 : index
    %c0_61 = arith.constant 0 : index
    %177 = vector.load %arg10[%c0_60, %c0_61] : memref<2x32xf32, #tpu.memory_space<vmem>>, vector<2x32xf32>
    tpu.vector_store %arg10[%c0_60, %c0_61], %166 {strides = array<i32>} : memref<2x32xf32, #tpu.memory_space<vmem>>, vector<2x32xf32>,
    return
  }
  func.func @transform_0(%arg0: i32, %arg1: i32) -> (i32, i32, i32) {
    %c0_i32 = arith.constant 0 : i32
    %c0_i32_0 = arith.constant 0 : i32
    return %arg1, %arg0, %c0_i32 : i32, i32, i32
  }
  func.func @transform_1(%arg0: i32, %arg1: i32) -> (i32, i32) {
    %c0_i32 = arith.constant 0 : i32
    %c0_i32_0 = arith.constant 0 : i32
    return %arg0, %c0_i32 : i32, i32
  }
  func.func @transform_2(%arg0: i32, %arg1: i32) -> (i32, i32) {
    %c0_i32 = arith.constant 0 : i32
    %c0_i32_0 = arith.constant 0 : i32
    %c0_i32_1 = arith.constant 0 : i32
    return %c0_i32, %c0_i32_0 : i32, i32
  }
  func.func @transform_3(%arg0: i32, %arg1: i32) -> (i32, i32) {
    %c0_i32 = arith.constant 0 : i32
    %c0_i32_0 = arith.constant 0 : i32
    %c0_i32_1 = arith.constant 0 : i32
    return %c0_i32, %c0_i32_0 : i32, i32
  }
  func.func @transform_4(%arg0: i32, %arg1: i32) -> (i32, i32) {
    %c0_i32 = arith.constant 0 : i32
    %c0_i32_0 = arith.constant 0 : i32
    %c0_i32_1 = arith.constant 0 : i32
    return %c0_i32, %c0_i32_0 : i32, i32
  }
  func.func @transform_5(%arg0: i32, %arg1: i32) -> (i32, i32) {
    %c0_i32 = arith.constant 0 : i32
    %c0_i32_0 = arith.constant 0 : i32
    %c0_i32_1 = arith.constant 0 : i32
    return %c0_i32, %c0_i32_0 : i32, i32
  }
  func.func @transform_6(%arg0: i32, %arg1: i32) -> (i32, i32) {
    %c0_i32 = arith.constant 0 : i32
    %c0_i32_0 = arith.constant 0 : i32
    %c0_i32_1 = arith.constant 0 : i32
    return %c0_i32, %c0_i32_0 : i32, i32
  }
  func.func @transform_7(%arg0: i32, %arg1: i32) -> (i32, i32, i32) {
    %c0_i32 = arith.constant 0 : i32
    %c0_i32_0 = arith.constant 0 : i32
    return %arg1, %arg0, %c0_i32 : i32, i32, i32
  }
  func.func @transform_8(%arg0: i32, %arg1: i32) -> (i32, i32) {
    %c0_i32 = arith.constant 0 : i32
    %c0_i32_0 = arith.constant 0 : i32
    return %arg0, %c0_i32 : i32, i32
  }
}

</mosaic_0001>

<llo_original>
// kernel: tpu_custom_call.1
$region0: #{tpu_custom_call.1}
  #allocation0 [shape = 'u32[]', space=smem, size = 0x4, offset = 0x4, fixed_abs, tag = 'smem constant byte address 0x4 - core index']
  #allocation1 [shape = 'u32[72,128]{1,0:T(1,128)}', space=vmem, size = 0x9000, scoped, tag = 'internal scratch']
  #allocation2 [shape = 'f32[1,1]{1,0:T(1,128)S(1)}', space=vmem, size = 0x200, scoped, tag = 'scoped memory for tpu_custom_call.1']
  %s0 = inlined_call_operand.vmem [shape: f32[8,2,1], index: 0, kind: input, shape index: {}]
  %s1 = inlined_call_operand.vmem [shape: f32[2,32], index: 1, kind: input, shape index: {}]
  %s2 = inlined_call_operand.hbm [shape: f32[32,32], index: 2, kind: input, shape index: {}]
  %s3 = inlined_call_operand.vmem [shape: f32[1,32], index: 3, kind: input, shape index: {}]
  %s4 = inlined_call_operand.vmem [shape: f32[1,32], index: 4, kind: input, shape index: {}]
  %s5 = inlined_call_operand.vmem [shape: f32[1,32], index: 5, kind: input, shape index: {}]
  %s6 = inlined_call_operand.<no memory space> [shape: f32[1,1], index: 6, kind: input, shape index: {}]
  %s7 = inlined_call_operand.vmem [shape: f32[8,2,1], index: 7, kind: output, shape index: {0}]
  %s8 = inlined_call_operand.hbm [shape: f32[2,32], index: 8, kind: output, shape index: {1}]
  %9 = xla_tuple %s7, %s8
  %s10 = sld [smem:[#allocation0]]
  $region54: #{tpu_custom_call.1} parent=0
    _
  %s12 = ssub.s32 1, %s10
  %s13 = scalar_select 0, %s12, %s10
  %v14 = vstv %s6
  %15 = vst [vmem:[#allocation2] sm:$0x1] %v14
  $region1: #{tpu_custom_call.1} parent=0
    #allocation3 [shape = 'u8[16384]{0}', space=vmem, size = 0x4000, scoped, tag = 'input window, operand 2, single buffered']
    #allocation4 [shape = 's32[1]{0}', space=sflag, size = 0x4, scoped, tag = 'scoped memory for tpu_custom_call.1']
    #allocation5 [shape = 's32[1]{0}', space=sflag, size = 0x4, scoped, tag = 'scoped memory for tpu_custom_call.1']
    #allocation6 [shape = 'u8[1024]{0}', space=vmem, size = 0x400, scoped, tag = 'output window, operand 1, single buffered']
    %16 = vsyncpa [#allocation4], 0
    %17 = vsyncpa [#allocation5], 0
    // Predicated region
    $region2: #{tpu_custom_call.1} parent=1 // pred_check
      _
    $region3: #{tpu_custom_call.1} parent=1 // pred_check_branch
      %19 = sbr.rel (0) target = $region5
    $region4: #{tpu_custom_call.1} parent=1 // pred_region
      _
    $region5: #{tpu_custom_call.1} parent=1 // pred_fallthru
      _
    // Predicated region
    $region6: #{tpu_custom_call.1} parent=1 // pred_check
      _
    $region7: #{tpu_custom_call.1} parent=1 // pred_check_branch
      %21 = sbr.rel (0) target = $region9
    $region8: #{tpu_custom_call.1} parent=1 // pred_region
      _
    $region9: #{tpu_custom_call.1} parent=1 // pred_fallthru
      _
    // Predicated region
    $region10: #{tpu_custom_call.1} parent=1 // pred_check
      _
    $region11: #{tpu_custom_call.1} parent=1 // pred_check_branch
      %23 = sbr.rel (0) target = $region13
    $region12: #{tpu_custom_call.1} parent=1 // pred_region
      %25 = vsyncadd [#allocation4], 0
      %s26 = sshll.u32 %s2, 4
      %s27 = int_to_ptr.hbm [resolvable:$true] %s26
      %s28 = sshll.u32 [#allocation3], 4
      %s29 = int_to_ptr.vmem [resolvable:$true] %s28
      %34 = dma.hbm_to_vmem [thread:$0]  %s27, 512, %s29, [#allocation4], 128, 128, 8
    $region13: #{tpu_custom_call.1} parent=1 // pred_fallthru
      _
    // Predicated region
    $region14: #{tpu_custom_call.1} parent=1 // pred_check
      _
    $region15: #{tpu_custom_call.1} parent=1 // pred_check_branch
      %36 = sbr.rel (0) target = $region17
    $region16: #{tpu_custom_call.1} parent=1 // pred_region
      _
    $region17: #{tpu_custom_call.1} parent=1 // pred_fallthru
      _
    // Predicated region
    $region18: #{tpu_custom_call.1} parent=1 // pred_check
      _
    $region19: #{tpu_custom_call.1} parent=1 // pred_check_branch
      %38 = sbr.rel (0) target = $region21
    $region20: #{tpu_custom_call.1} parent=1 // pred_region
      _
    $region21: #{tpu_custom_call.1} parent=1 // pred_fallthru
      _
    // Predicated region
    $region22: #{tpu_custom_call.1} parent=1 // pred_check
      _
    $region23: #{tpu_custom_call.1} parent=1 // pred_check_branch
      %40 = sbr.rel (0) target = $region25
    $region24: #{tpu_custom_call.1} parent=1 // pred_region
      _
    $region25: #{tpu_custom_call.1} parent=1 // pred_fallthru
      _
    // Predicated region
    $region26: #{tpu_custom_call.1} parent=1 // pred_check
      _
    $region27: #{tpu_custom_call.1} parent=1 // pred_check_branch
      %42 = sbr.rel (0) target = $region29
    $region28: #{tpu_custom_call.1} parent=1 // pred_region
      _
    $region29: #{tpu_custom_call.1} parent=1 // pred_fallthru
      _
    // Predicated region
    $region30: #{tpu_custom_call.1} parent=1 // pred_check
      _
    $region31: #{tpu_custom_call.1} parent=1 // pred_check_branch
      %44 = sbr.rel (0) target = $region33
    $region32: #{tpu_custom_call.1} parent=1 // pred_region
      %46 = dma.done [#allocation4], 512
    $region33: #{tpu_custom_call.1} parent=1 // pred_fallthru
      _
    %p47 = scmp.eq.s32.totalorder 0, 0
    // Predicated region
    $region34: #{tpu_custom_call.1} parent=1 // pred_check
      %p48 = pneg %p47
    $region35: #{tpu_custom_call.1} parent=1 // pred_check_branch
      %50 = sbr.rel (%p48) target = $region37
    $region36: #{tpu_custom_call.1} parent=1 // pred_region
      %v51 = vld [vmem:[%s1] sm:$0x3]
      %vm52 = vcmask 254976
      %53 = vst.msk [vmem:[#allocation6] sm:$0x3] %vm52, %v51
    $region37: #{tpu_custom_call.1} parent=1 // pred_fallthru
      _
    %v54 = vld [vmem:[#allocation3] sm:$0xff]
    %v55 = vld [vmem:[#allocation3 + $0x8] sm:$0xff]
    %v56 = vld [vmem:[#allocation3 + $0x10] sm:$0xff]
    %v57 = vld [vmem:[#allocation3 + $0x18] sm:$0xff]
    %v58 = vld [vmem:[%s3] sm:$0x1]
    %v59 = vld [vmem:[%s4] sm:$0x1]
    %v60 = vld [vmem:[%s5] sm:$0x1]
    %v61 = vld [vmem:[#allocation2] sm:$0x1]
    %v62 = vld [vmem:[#allocation6] sm:$0x3]
    %v63 = vld [vmem:[%s0] sm:$0x3]
    %65 = vset.pattern.permute.xlu0 0
    %66 = vperm.xlu0 %65, %v63
    %v67 = vpop.permute.xlu0 %66
    %v70 = vperm.slane %v58, 0
    %v72 = vmul.f32 %v67, %v70
    %v74 = vperm.slane %v59, 0
    %v76 = vadd.f32 %v72, %v74
    %vm77 = vcmask 261120
    %v79 = vsel %vm77, %v62, 0
    %81 = vmatpush.msra.mxu0 0.0
    %82 = vmatpush.msra.mxu0 0.0
    %83 = vmatpush.msra.mxu0 0.0
    %84 = vmatpush.msra.mxu0 0.0
    %85 = vmatpush.msra.mxu0 0.0
    %86 = vmatpush.msra.mxu0 0.0
    %87 = vmatpush.msra.mxu0 0.0
    %88 = vmatpush.msra.mxu0 0.0
    %89 = vmatpush.msra.mxu0 0.0
    %90 = vmatpush.msra.mxu0 0.0
    %91 = vmatpush.msra.mxu0 0.0
    %92 = vmatpush.msra.mxu0 0.0
    %93 = vmatpush.msra.mxu0 %v57
    %94 = vmatpush.msra.mxu0 %v56
    %95 = vmatpush.msra.mxu0 %v55
    %96 = vmatpush.msra.mxu0 %v54
    %97 = vmatmul.f32.gmra.mxu0 %v79
    %v98 = vpop.f32.mrf.mxu0
    %v99 = vadd.f32 0.0, %v98
    %100 = vdwg.mxu0
    %v101 = vadd.f32 %v76, %v99
    %v102 = vtanh.pop %v101
    %v104 = vperm.slane %v60, 0
    %v106 = vmul.f32 %v102, %v104
    %vm107 = vcmask 254976
    %v108 = vsel %vm107, %v106, 0.0
    %109 = vadd.xlane.f32.xlu0 %v108
    %v110 = vpop.xlane.xlu0 %109
    %v112 = vperm.slane %v61, 0
    %v114 = vadd.f32 %v110, %v112
    %vm115 = vcmask 1024
    %116 = vst.msk [vmem:[%s7] sm:$0x3] %vm115, %v114
    %s117 = scalar_lea.vmem %s0, 2
    %v118 = vld [vmem:[%s117] sm:$0x3]
    %120 = vset.pattern.permute.xlu0 0
    %121 = vperm.xlu0 %120, %v118
    %v122 = vpop.permute.xlu0 %121
    %v124 = vmul.f32 %v122, %v70
    %v125 = vadd.f32 %v124, %v74
    %v127 = vsel %vm77, %v102, 0
    %129 = vmatpush.msra.mxu0 0.0
    %130 = vmatpush.msra.mxu0 0.0
    %131 = vmatpush.msra.mxu0 0.0
    %132 = vmatpush.msra.mxu0 0.0
    %133 = vmatpush.msra.mxu0 0.0
    %134 = vmatpush.msra.mxu0 0.0
    %135 = vmatpush.msra.mxu0 0.0
    %136 = vmatpush.msra.mxu0 0.0
    %137 = vmatpush.msra.mxu0 0.0
    %138 = vmatpush.msra.mxu0 0.0
    %139 = vmatpush.msra.mxu0 0.0
    %140 = vmatpush.msra.mxu0 0.0
    %141 = vmatpush.msra.mxu0 %v57
    %142 = vmatpush.msra.mxu0 %v56
    %143 = vmatpush.msra.mxu0 %v55
    %144 = vmatpush.msra.mxu0 %v54
    %145 = vmatmul.f32.gmra.mxu0 %v127
    %v146 = vpop.f32.mrf.mxu0
    %v147 = vadd.f32 0.0, %v146
    %148 = vdwg.mxu0
    %v149 = vadd.f32 %v125, %v147
    %v150 = vtanh.pop %v149
    %v151 = vmul.f32 %v150, %v104
    %v152 = vsel %vm107, %v151, 0.0
    %153 = vadd.xlane.f32.xlu0 %v152
    %v154 = vpop.xlane.xlu0 %153
    %v155 = vadd.f32 %v154, %v112
    %s156 = scalar_lea.vmem %s7, 2
    %157 = vst.msk [vmem:[%s156] sm:$0x3] %vm115, %v155
    %s158 = scalar_lea.vmem %s0, 4
    %v159 = vld [vmem:[%s158] sm:$0x3]
    %161 = vset.pattern.permute.xlu0 0
    %162 = vperm.xlu0 %161, %v159
    %v163 = vpop.permute.xlu0 %162
    %v165 = vmul.f32 %v163, %v70
    %v166 = vadd.f32 %v165, %v74
    %v168 = vsel %vm77, %v150, 0
    %170 = vmatpush.msra.mxu0 0.0
    %171 = vmatpush.msra.mxu0 0.0
    %172 = vmatpush.msra.mxu0 0.0
    %173 = vmatpush.msra.mxu0 0.0
    %174 = vmatpush.msra.mxu0 0.0
    %175 = vmatpush.msra.mxu0 0.0
    %176 = vmatpush.msra.mxu0 0.0
    %177 = vmatpush.msra.mxu0 0.0
    %178 = vmatpush.msra.mxu0 0.0
    %179 = vmatpush.msra.mxu0 0.0
    %180 = vmatpush.msra.mxu0 0.0
    %181 = vmatpush.msra.mxu0 0.0
    %182 = vmatpush.msra.mxu0 %v57
    %183 = vmatpush.msra.mxu0 %v56
    %184 = vmatpush.msra.mxu0 %v55
    %185 = vmatpush.msra.mxu0 %v54
    %186 = vmatmul.f32.gmra.mxu0 %v168
    %v187 = vpop.f32.mrf.mxu0
    %v188 = vadd.f32 0.0, %v187
    %189 = vdwg.mxu0
    %v190 = vadd.f32 %v166, %v188
    %v191 = vtanh.pop %v190
    %v192 = vmul.f32 %v191, %v104
    %v193 = vsel %vm107, %v192, 0.0
    %194 = vadd.xlane.f32.xlu0 %v193
    %v195 = vpop.xlane.xlu0 %194
    %v196 = vadd.f32 %v195, %v112
    %s197 = scalar_lea.vmem %s7, 4
    %198 = vst.msk [vmem:[%s197] sm:$0x3] %vm115, %v196
    %s199 = scalar_lea.vmem %s0, 6
    %v200 = vld [vmem:[%s199] sm:$0x3]
    %202 = vset.pattern.permute.xlu0 0
    %203 = vperm.xlu0 %202, %v200
    %v204 = vpop.permute.xlu0 %203
    %v206 = vmul.f32 %v204, %v70
    %v207 = vadd.f32 %v206, %v74
    %v209 = vsel %vm77, %v191, 0
    %211 = vmatpush.msra.mxu0 0.0
    %212 = vmatpush.msra.mxu0 0.0
    %213 = vmatpush.msra.mxu0 0.0
    %214 = vmatpush.msra.mxu0 0.0
    %215 = vmatpush.msra.mxu0 0.0
    %216 = vmatpush.msra.mxu0 0.0
    %217 = vmatpush.msra.mxu0 0.0
    %218 = vmatpush.msra.mxu0 0.0
    %219 = vmatpush.msra.mxu0 0.0
    %220 = vmatpush.msra.mxu0 0.0
    %221 = vmatpush.msra.mxu0 0.0
    %222 = vmatpush.msra.mxu0 0.0
    %223 = vmatpush.msra.mxu0 %v57
    %224 = vmatpush.msra.mxu0 %v56
    %225 = vmatpush.msra.mxu0 %v55
    %226 = vmatpush.msra.mxu0 %v54
    %227 = vmatmul.f32.gmra.mxu0 %v209
    %v228 = vpop.f32.mrf.mxu0
    %v229 = vadd.f32 0.0, %v228
    %230 = vdwg.mxu0
    %v231 = vadd.f32 %v207, %v229
    %v232 = vtanh.pop %v231
    %v233 = vmul.f32 %v232, %v104
    %v234 = vsel %vm107, %v233, 0.0
    %235 = vadd.xlane.f32.xlu0 %v234
    %v236 = vpop.xlane.xlu0 %235
    %v237 = vadd.f32 %v236, %v112
    %s238 = scalar_lea.vmem %s7, 6
    %239 = vst.msk [vmem:[%s238] sm:$0x3] %vm115, %v237
    %s240 = scalar_lea.vmem %s0, 8
    %v241 = vld [vmem:[%s240] sm:$0x3]
    %243 = vset.pattern.permute.xlu0 0
    %244 = vperm.xlu0 %243, %v241
    %v245 = vpop.permute.xlu0 %244
    %v247 = vmul.f32 %v245, %v70
    %v248 = vadd.f32 %v247, %v74
    %v250 = vsel %vm77, %v232, 0
    %252 = vmatpush.msra.mxu0 0.0
    %253 = vmatpush.msra.mxu0 0.0
    %254 = vmatpush.msra.mxu0 0.0
    %255 = vmatpush.msra.mxu0 0.0
    %256 = vmatpush.msra.mxu0 0.0
    %257 = vmatpush.msra.mxu0 0.0
    %258 = vmatpush.msra.mxu0 0.0
    %259 = vmatpush.msra.mxu0 0.0
    %260 = vmatpush.msra.mxu0 0.0
    %261 = vmatpush.msra.mxu0 0.0
    %262 = vmatpush.msra.mxu0 0.0
    %263 = vmatpush.msra.mxu0 0.0
    %264 = vmatpush.msra.mxu0 %v57
    %265 = vmatpush.msra.mxu0 %v56
    %266 = vmatpush.msra.mxu0 %v55
    %267 = vmatpush.msra.mxu0 %v54
    %268 = vmatmul.f32.gmra.mxu0 %v250
    %v269 = vpop.f32.mrf.mxu0
    %v270 = vadd.f32 0.0, %v269
    %271 = vdwg.mxu0
    %v272 = vadd.f32 %v248, %v270
    %v273 = vtanh.pop %v272
    %v274 = vmul.f32 %v273, %v104
    %v275 = vsel %vm107, %v274, 0.0
    %276 = vadd.xlane.f32.xlu0 %v275
    %v277 = vpop.xlane.xlu0 %276
    %v278 = vadd.f32 %v277, %v112
    %s279 = scalar_lea.vmem %s7, 8
    %280 = vst.msk [vmem:[%s279] sm:$0x3] %vm115, %v278
    %s281 = scalar_lea.vmem %s0, 10
    %v282 = vld [vmem:[%s281] sm:$0x3]
    %284 = vset.pattern.permute.xlu0 0
    %285 = vperm.xlu0 %284, %v282
    %v286 = vpop.permute.xlu0 %285
    %v288 = vmul.f32 %v286, %v70
    %v289 = vadd.f32 %v288, %v74
    %v291 = vsel %vm77, %v273, 0
    %293 = vmatpush.msra.mxu0 0.0
    %294 = vmatpush.msra.mxu0 0.0
    %295 = vmatpush.msra.mxu0 0.0
    %296 = vmatpush.msra.mxu0 0.0
    %297 = vmatpush.msra.mxu0 0.0
    %298 = vmatpush.msra.mxu0 0.0
    %299 = vmatpush.msra.mxu0 0.0
    %300 = vmatpush.msra.mxu0 0.0
    %301 = vmatpush.msra.mxu0 0.0
    %302 = vmatpush.msra.mxu0 0.0
    %303 = vmatpush.msra.mxu0 0.0
    %304 = vmatpush.msra.mxu0 0.0
    %305 = vmatpush.msra.mxu0 %v57
    %306 = vmatpush.msra.mxu0 %v56
    %307 = vmatpush.msra.mxu0 %v55
    %308 = vmatpush.msra.mxu0 %v54
    %309 = vmatmul.f32.gmra.mxu0 %v291
    %v310 = vpop.f32.mrf.mxu0
    %v311 = vadd.f32 0.0, %v310
    %312 = vdwg.mxu0
    %v313 = vadd.f32 %v289, %v311
    %v314 = vtanh.pop %v313
    %v315 = vmul.f32 %v314, %v104
    %v316 = vsel %vm107, %v315, 0.0
    %317 = vadd.xlane.f32.xlu0 %v316
    %v318 = vpop.xlane.xlu0 %317
    %v319 = vadd.f32 %v318, %v112
    %s320 = scalar_lea.vmem %s7, 10
    %321 = vst.msk [vmem:[%s320] sm:$0x3] %vm115, %v319
    %s322 = scalar_lea.vmem %s0, 12
    %v323 = vld [vmem:[%s322] sm:$0x3]
    %325 = vset.pattern.permute.xlu0 0
    %326 = vperm.xlu0 %325, %v323
    %v327 = vpop.permute.xlu0 %326
    %v329 = vmul.f32 %v327, %v70
    %v330 = vadd.f32 %v329, %v74
    %v332 = vsel %vm77, %v314, 0
    %334 = vmatpush.msra.mxu0 0.0
    %335 = vmatpush.msra.mxu0 0.0
    %336 = vmatpush.msra.mxu0 0.0
    %337 = vmatpush.msra.mxu0 0.0
    %338 = vmatpush.msra.mxu0 0.0
    %339 = vmatpush.msra.mxu0 0.0
    %340 = vmatpush.msra.mxu0 0.0
    %341 = vmatpush.msra.mxu0 0.0
    %342 = vmatpush.msra.mxu0 0.0
    %343 = vmatpush.msra.mxu0 0.0
    %344 = vmatpush.msra.mxu0 0.0
    %345 = vmatpush.msra.mxu0 0.0
    %346 = vmatpush.msra.mxu0 %v57
    %347 = vmatpush.msra.mxu0 %v56
    %348 = vmatpush.msra.mxu0 %v55
    %349 = vmatpush.msra.mxu0 %v54
    %350 = vmatmul.f32.gmra.mxu0 %v332
    %v351 = vpop.f32.mrf.mxu0
    %v352 = vadd.f32 0.0, %v351
    %353 = vdwg.mxu0
    %v354 = vadd.f32 %v330, %v352
    %v355 = vtanh.pop %v354
    %v356 = vmul.f32 %v355, %v104
    %v357 = vsel %vm107, %v356, 0.0
    %358 = vadd.xlane.f32.xlu0 %v357
    %v359 = vpop.xlane.xlu0 %358
    %v360 = vadd.f32 %v359, %v112
    %s361 = scalar_lea.vmem %s7, 12
    %362 = vst.msk [vmem:[%s361] sm:$0x3] %vm115, %v360
    %s363 = scalar_lea.vmem %s0, 14
    %v364 = vld [vmem:[%s363] sm:$0x3]
    %366 = vset.pattern.permute.xlu0 0
    %367 = vperm.xlu0 %366, %v364
    %v368 = vpop.permute.xlu0 %367
    %v370 = vmul.f32 %v368, %v70
    %v371 = vadd.f32 %v370, %v74
    %v373 = vsel %vm77, %v355, 0
    %375 = vmatpush.msra.mxu0 0.0
    %376 = vmatpush.msra.mxu0 0.0
    %377 = vmatpush.msra.mxu0 0.0
    %378 = vmatpush.msra.mxu0 0.0
    %379 = vmatpush.msra.mxu0 0.0
    %380 = vmatpush.msra.mxu0 0.0
    %381 = vmatpush.msra.mxu0 0.0
    %382 = vmatpush.msra.mxu0 0.0
    %383 = vmatpush.msra.mxu0 0.0
    %384 = vmatpush.msra.mxu0 0.0
    %385 = vmatpush.msra.mxu0 0.0
    %386 = vmatpush.msra.mxu0 0.0
    %387 = vmatpush.msra.mxu0 %v57
    %388 = vmatpush.msra.mxu0 %v56
    %389 = vmatpush.msra.mxu0 %v55
    %390 = vmatpush.msra.mxu0 %v54
    %391 = vmatmul.f32.gmra.mxu0 %v373
    %v392 = vpop.f32.mrf.mxu0
    %v393 = vadd.f32 0.0, %v392
    %394 = vdwg.mxu0
    %v395 = vadd.f32 %v371, %v393
    %v396 = vtanh.pop %v395
    %v397 = vmul.f32 %v396, %v104
    %v398 = vsel %vm107, %v397, 0.0
    %399 = vadd.xlane.f32.xlu0 %v398
    %v400 = vpop.xlane.xlu0 %399
    %v401 = vadd.f32 %v400, %v112
    %s402 = scalar_lea.vmem %s7, 14
    %403 = vst.msk [vmem:[%s402] sm:$0x3] %vm115, %v401
    %404 = vst.msk [vmem:[#allocation6] sm:$0x3] %vm107, %v396
    // Predicated region
    $region38: #{tpu_custom_call.1} parent=1 // pred_check
      _
    $region39: #{tpu_custom_call.1} parent=1 // pred_check_branch
      %406 = sbr.rel (0) target = $region41
    $region40: #{tpu_custom_call.1} parent=1 // pred_region
      _
    $region41: #{tpu_custom_call.1} parent=1 // pred_fallthru
      _
    // Predicated region
    $region42: #{tpu_custom_call.1} parent=1 // pred_check
      _
    $region43: #{tpu_custom_call.1} parent=1 // pred_check_branch
      %408 = sbr.rel (0) target = $region45
    $region44: #{tpu_custom_call.1} parent=1 // pred_region
      %410 = vsyncadd [#allocation5], 0
      %s412 = sshll.u32 [#allocation6], 4
      %s413 = int_to_ptr.vmem [resolvable:$true] %s412
      %s414 = sshll.u32 %s8, 4
      %s415 = int_to_ptr.hbm [resolvable:$true] %s414
      %417 = dma.vmem_to_hbm [thread:$0]  %s413, 32, %s415, [#allocation5]
    $region45: #{tpu_custom_call.1} parent=1 // pred_fallthru
      _
    // Predicated region
    $region46: #{tpu_custom_call.1} parent=1 // pred_check
      _
    $region47: #{tpu_custom_call.1} parent=1 // pred_check_branch
      %419 = sbr.rel (0) target = $region49
    $region48: #{tpu_custom_call.1} parent=1 // pred_region
      _
    $region49: #{tpu_custom_call.1} parent=1 // pred_fallthru
      _
    // Predicated region
    $region50: #{tpu_custom_call.1} parent=1 // pred_check
      _
    $region51: #{tpu_custom_call.1} parent=1 // pred_check_branch
      %421 = sbr.rel (0) target = $region53
    $region52: #{tpu_custom_call.1} parent=1 // pred_region
      %423 = dma.done [#allocation5], 32
    $region53: #{tpu_custom_call.1} parent=1 // pred_fallthru
      _
    %424 = vsyncpa [#allocation4], 1
    %425 = vsyncpa [#allocation5], 1

</llo_original>
